<compile_context>
chip_gen: v7x
topology: tpu7x:2x2x1
jax: 0.10.0
libtpu: 0.0.40
codegen_flags: <defaults>
</compile_context>

<pallas_src>
import jax
import jax.numpy as jnp
from jax import lax
from jax.experimental import pallas as pl
from jax.experimental.pallas import tpu as pltpu


_LANE = 128          # pad N (num_classes) up to a full lane width
_B_TILE = 256        # B-tile size used only when the batch is large


def _linear_kernel(x_ref, w_ref, b_ref, o_ref):
    # x_ref: [B(or TB), K]   w_ref: [N_pad, K]   b_ref: [1, N_pad]
    # Contract the last (lane) dims of both operands on the MXU with f32
    # accumulation, then broadcast-add the bias on the VPU.
    acc = lax.dot_general(
        x_ref[...], w_ref[...],
        dimension_numbers=(((1,), (1,)), ((), ())),
        preferred_element_type=jnp.float32,
    )
    o_ref[...] = (acc + b_ref[...]).astype(o_ref.dtype)


def server_model_forward(x, weight, bias):
    """x: [B, in_features]; weight: [num_classes, in_features] (PyTorch nn.Linear
    layout); bias: [num_classes]. Returns [B, num_classes]."""
    B, in_features = x.shape
    num_classes = weight.shape[0]

    # Lane-dense padding of the tiny output dimension (6 -> 128). Ideally done
    # once at model-init time; it is a cheap lane-aligned pad either way.
    n_pad = max(_LANE, ((num_classes + _LANE - 1) // _LANE) * _LANE)
    w_pad = jnp.zeros((n_pad, in_features), dtype=weight.dtype)
    w_pad = w_pad.at[:num_classes, :].set(weight)
    b_pad = jnp.zeros((1, n_pad), dtype=bias.dtype)
    b_pad = b_pad.at[0, :num_classes].set(bias)

    vmem = pltpu.MemorySpace.VMEM

    if B >= 2 * _B_TILE and B % _B_TILE == 0:
        # Large batch: tile along B only; K and padded N stay whole per block.
        # Parallel B axis -> megacore sharding (both TensorCores on v7x).
        out_pad = pl.pallas_call(
            _linear_kernel,
            out_shape=jax.ShapeDtypeStruct((B, n_pad), x.dtype),
            grid=(B // _B_TILE,),
            in_specs=[
                pl.BlockSpec((_B_TILE, in_features), lambda i: (i, 0)),
                pl.BlockSpec((n_pad, in_features), lambda i: (0, 0)),
                pl.BlockSpec((1, n_pad), lambda i: (0, 0)),
            ],
            out_specs=pl.BlockSpec((_B_TILE, n_pad), lambda i: (i, 0)),
            compiler_params=pltpu.CompilerParams(
                dimension_semantics=("parallel",)),
        )(x, w_pad, b_pad)
    else:
        # Small batch: no grid at all — whole-array VMEM blocks, one MXU pass.
        out_pad = pl.pallas_call(
            _linear_kernel,
            out_shape=jax.ShapeDtypeStruct((B, n_pad), x.dtype),
            in_specs=[
                pl.BlockSpec(memory_space=vmem),
                pl.BlockSpec(memory_space=vmem),
                pl.BlockSpec(memory_space=vmem),
            ],
            out_specs=pl.BlockSpec(memory_space=vmem),
        )(x, w_pad, b_pad)

    return out_pad[:, :num_classes]


if __name__ == "__main__":
    # Module config (matches serverModel defaults): num_classes=6, num_clients=3, dim=256
    num_classes = 6
    num_clients = 3
    dim = 256
    in_features = dim * num_clients  # 768
    batch = 8

    key = jax.random.PRNGKey(0)
    kx, kw, kb = jax.random.split(key, 3)

    # Deterministic synthetic parameters (PyTorch nn.Linear layout: [out, in]).
    weight = jax.random.normal(kw, (num_classes, in_features), jnp.float32) * 0.02
    bias = jax.random.normal(kb, (num_classes,), jnp.float32) * 0.01

    x = jax.random.normal(kx, (batch, in_features), jnp.float32)

    out = server_model_forward(x, weight, bias)
    out = jax.block_until_ready(out)

    # Reference check against plain JAX.
    ref = x @ weight.T + bias
    assert out.shape == (batch, num_classes)
    assert jnp.allclose(out, ref, atol=1e-4, rtol=1e-4), "mismatch vs reference"

    print("KERNEL_OK")
</pallas_src>

<mosaic_0001>
module attributes {stable_mosaic.version = 11 : i64} {
  func.func @_linear_kernel(%arg0: memref<8x768xf32, #tpu.memory_space<vmem>>, %arg1: memref<128x768xf32, #tpu.memory_space<vmem>>, %arg2: memref<1x128xf32, #tpu.memory_space<vmem>>, %arg3: memref<8x128xf32, #tpu.memory_space<vmem>>) attributes {dimension_semantics = [], scalar_prefetch = 0 : i64, scratch_operands = 0 : i64, tpu.core_type = #tpu.core_type<tc>} {
    %c0 = arith.constant 0 : index
    %c0_0 = arith.constant 0 : index
    %0 = vector.load %arg0[%c0, %c0_0] : memref<8x768xf32, #tpu.memory_space<vmem>>, vector<8x768xf32>
    %c0_1 = arith.constant 0 : index
    %c0_2 = arith.constant 0 : index
    %1 = vector.load %arg1[%c0_1, %c0_2] : memref<128x768xf32, #tpu.memory_space<vmem>>, vector<128x768xf32>
    %cst = arith.constant dense<0.000000e+00> : vector<8x128xf32>
    %2 = tpu.matmul %0, %1, %cst {dimension_numbers = #tpu.dot_dimension_numbers<[1], [1], [0], [0], [0, 0, 1, 0], [], []>} : vector<8x768xf32>, vector<128x768xf32>, vector<8x128xf32> -> vector<8x128xf32>
    %c0_3 = arith.constant 0 : index
    %c0_4 = arith.constant 0 : index
    %3 = vector.load %arg2[%c0_3, %c0_4] : memref<1x128xf32, #tpu.memory_space<vmem>>, vector<1x128xf32>
    %4 = vector.broadcast %3 : vector<1x128xf32> to vector<8x128xf32>
    %5 = arith.addf %2, %4 : vector<8x128xf32>
    %c0_5 = arith.constant 0 : index
    %c0_6 = arith.constant 0 : index
    %6 = vector.load %arg3[%c0_5, %c0_6] : memref<8x128xf32, #tpu.memory_space<vmem>>, vector<8x128xf32>
    tpu.vector_store %arg3[%c0_5, %c0_6], %5 {strides = array<i32>} : memref<8x128xf32, #tpu.memory_space<vmem>>, vector<8x128xf32>,
    return
  }
}

</mosaic_0001>

<llo_original>
// kernel: tpu_custom_call.1
$region0: #{tpu_custom_call.1}
  #allocation0 [shape = 'u32[]', space=smem, size = 0x4, offset = 0x4, fixed_abs, tag = 'smem constant byte address 0x4 - core index']
  #allocation1 [shape = 'u32[144,128]{1,0:T(1,128)}', space=vmem, size = 0x12000, scoped, tag = 'internal scratch']
  %s0 = inlined_call_operand.hbm [shape: f32[8,768], index: 0, kind: input, shape index: {}]
  %s1 = inlined_call_operand.hbm [shape: f32[128,768], index: 1, kind: input, shape index: {}]
  %s2 = inlined_call_operand.vmem [shape: f32[1,128], index: 2, kind: input, shape index: {}]
  %s3 = inlined_call_operand.hbm [shape: f32[8,128], index: 3, kind: output, shape index: {}]
  %s4 = sld [smem:[#allocation0]]
  $region30: #{tpu_custom_call.1} parent=0
    _
  %s6 = ssub.s32 1, %s4
  %s7 = scalar_select 0, %s6, %s4
  $region1: #{tpu_custom_call.1} parent=0
    #allocation2 [shape = 'u8[24576]{0}', space=vmem, size = 0x6000, scoped, tag = 'input window, operand 0, single buffered']
    #allocation3 [shape = 's32[1]{0}', space=sflag, size = 0x4, scoped, tag = 'scoped memory for tpu_custom_call.1']
    #allocation4 [shape = 's32[1]{0}', space=sflag, size = 0x4, scoped, tag = 'scoped memory for tpu_custom_call.1']
    #allocation5 [shape = 'u8[393216]{0}', space=vmem, size = 0x60000, scoped, tag = 'input window, operand 1, single buffered']
    #allocation6 [shape = 's32[1]{0}', space=sflag, size = 0x4, scoped, tag = 'scoped memory for tpu_custom_call.1']
    #allocation7 [shape = 'u8[4096]{0}', space=vmem, size = 0x1000, scoped, tag = 'output window, operand 0, single buffered']
    %8 = vsyncpa [#allocation3], 0
    %9 = vsyncpa [#allocation6], 0
    %10 = vsyncpa [#allocation4], 0
    // Predicated region
    $region2: #{tpu_custom_call.1} parent=1 // pred_check
      _
    $region3: #{tpu_custom_call.1} parent=1 // pred_check_branch
      %12 = sbr.rel (0) target = $region5
    $region4: #{tpu_custom_call.1} parent=1 // pred_region
      %s14 = ssub.s32 768, 768
      %15 = vsyncadd [#allocation3], %s14
      %s17 = sshll.u32 [#allocation2], 4
      %s18 = int_to_ptr.vmem [resolvable:$true] %s17
      %20 = dma.hbm_to_vmem [thread:$0]  %s0, 768, %s18, [#allocation3]
    $region5: #{tpu_custom_call.1} parent=1 // pred_fallthru
      _
    // Predicated region
    $region6: #{tpu_custom_call.1} parent=1 // pred_check
      _
    $region7: #{tpu_custom_call.1} parent=1 // pred_check_branch
      %22 = sbr.rel (0) target = $region9
    $region8: #{tpu_custom_call.1} parent=1 // pred_region
      %s24 = ssub.s32 12288, 12288
      %25 = vsyncadd [#allocation6], %s24
      %s26 = sshll.u32 [#allocation5], 4
      %s27 = int_to_ptr.vmem [resolvable:$true] %s26
      %32 = dma.hbm_to_vmem [thread:$0]  %s1, 12288, %s27, [#allocation6], 768, 768, 48
    $region9: #{tpu_custom_call.1} parent=1 // pred_fallthru
      _
    // Predicated region
    $region10: #{tpu_custom_call.1} parent=1 // pred_check
      _
    $region11: #{tpu_custom_call.1} parent=1 // pred_check_branch
      %34 = sbr.rel (0) target = $region13
    $region12: #{tpu_custom_call.1} parent=1 // pred_region
      _
    $region13: #{tpu_custom_call.1} parent=1 // pred_fallthru
      _
    // Predicated region
    $region14: #{tpu_custom_call.1} parent=1 // pred_check
      _
    $region15: #{tpu_custom_call.1} parent=1 // pred_check_branch
      %36 = sbr.rel (0) target = $region17
    $region16: #{tpu_custom_call.1} parent=1 // pred_region
      %37 = dma.done [#allocation3], 768
    $region17: #{tpu_custom_call.1} parent=1 // pred_fallthru
      _
    // Predicated region
    $region18: #{tpu_custom_call.1} parent=1 // pred_check
      _
    $region19: #{tpu_custom_call.1} parent=1 // pred_check_branch
      %39 = sbr.rel (0) target = $region21
    $region20: #{tpu_custom_call.1} parent=1 // pred_region
      %40 = dma.done [#allocation6], 12288
    $region21: #{tpu_custom_call.1} parent=1 // pred_fallthru
      _
    %v41 = vld [vmem:[#allocation2] sm:$0xff]
    %v42 = vld [vmem:[#allocation2 + $0x8] sm:$0xff]
    %v43 = vld [vmem:[#allocation2 + $0x10] sm:$0xff]
    %v44 = vld [vmem:[#allocation2 + $0x18] sm:$0xff]
    %v45 = vld [vmem:[#allocation2 + $0x20] sm:$0xff]
    %v46 = vld [vmem:[#allocation2 + $0x28] sm:$0xff]
    %v47 = vld [vmem:[#allocation5] sm:$0xff]
    %v48 = vld [vmem:[#allocation5 + $0x8] sm:$0xff]
    %v49 = vld [vmem:[#allocation5 + $0x10] sm:$0xff]
    %v50 = vld [vmem:[#allocation5 + $0x18] sm:$0xff]
    %v51 = vld [vmem:[#allocation5 + $0x20] sm:$0xff]
    %v52 = vld [vmem:[#allocation5 + $0x28] sm:$0xff]
    %v53 = vld [vmem:[#allocation5 + $0x30] sm:$0xff]
    %v54 = vld [vmem:[#allocation5 + $0x38] sm:$0xff]
    %v55 = vld [vmem:[#allocation5 + $0x40] sm:$0xff]
    %v56 = vld [vmem:[#allocation5 + $0x48] sm:$0xff]
    %v57 = vld [vmem:[#allocation5 + $0x50] sm:$0xff]
    %v58 = vld [vmem:[#allocation5 + $0x58] sm:$0xff]
    %v59 = vld [vmem:[#allocation5 + $0x60] sm:$0xff]
    %v60 = vld [vmem:[#allocation5 + $0x68] sm:$0xff]
    %v61 = vld [vmem:[#allocation5 + $0x70] sm:$0xff]
    %v62 = vld [vmem:[#allocation5 + $0x78] sm:$0xff]
    %v63 = vld [vmem:[#allocation5 + $0x80] sm:$0xff]
    %v64 = vld [vmem:[#allocation5 + $0x88] sm:$0xff]
    %v65 = vld [vmem:[#allocation5 + $0x90] sm:$0xff]
    %v66 = vld [vmem:[#allocation5 + $0x98] sm:$0xff]
    %v67 = vld [vmem:[#allocation5 + $0xa0] sm:$0xff]
    %v68 = vld [vmem:[#allocation5 + $0xa8] sm:$0xff]
    %v69 = vld [vmem:[#allocation5 + $0xb0] sm:$0xff]
    %v70 = vld [vmem:[#allocation5 + $0xb8] sm:$0xff]
    %v71 = vld [vmem:[#allocation5 + $0xc0] sm:$0xff]
    %v72 = vld [vmem:[#allocation5 + $0xc8] sm:$0xff]
    %v73 = vld [vmem:[#allocation5 + $0xd0] sm:$0xff]
    %v74 = vld [vmem:[#allocation5 + $0xd8] sm:$0xff]
    %v75 = vld [vmem:[#allocation5 + $0xe0] sm:$0xff]
    %v76 = vld [vmem:[#allocation5 + $0xe8] sm:$0xff]
    %v77 = vld [vmem:[#allocation5 + $0xf0] sm:$0xff]
    %v78 = vld [vmem:[#allocation5 + $0xf8] sm:$0xff]
    %v79 = vld [vmem:[#allocation5 + $0x100] sm:$0xff]
    %v80 = vld [vmem:[#allocation5 + $0x108] sm:$0xff]
    %v81 = vld [vmem:[#allocation5 + $0x110] sm:$0xff]
    %v82 = vld [vmem:[#allocation5 + $0x118] sm:$0xff]
    %v83 = vld [vmem:[#allocation5 + $0x120] sm:$0xff]
    %v84 = vld [vmem:[#allocation5 + $0x128] sm:$0xff]
    %v85 = vld [vmem:[#allocation5 + $0x130] sm:$0xff]
    %v86 = vld [vmem:[#allocation5 + $0x138] sm:$0xff]
    %v87 = vld [vmem:[#allocation5 + $0x140] sm:$0xff]
    %v88 = vld [vmem:[#allocation5 + $0x148] sm:$0xff]
    %v89 = vld [vmem:[#allocation5 + $0x150] sm:$0xff]
    %v90 = vld [vmem:[#allocation5 + $0x158] sm:$0xff]
    %v91 = vld [vmem:[#allocation5 + $0x160] sm:$0xff]
    %v92 = vld [vmem:[#allocation5 + $0x168] sm:$0xff]
    %v93 = vld [vmem:[#allocation5 + $0x170] sm:$0xff]
    %v94 = vld [vmem:[#allocation5 + $0x178] sm:$0xff]
    %v95 = vld [vmem:[#allocation5 + $0x180] sm:$0xff]
    %v96 = vld [vmem:[#allocation5 + $0x188] sm:$0xff]
    %v97 = vld [vmem:[#allocation5 + $0x190] sm:$0xff]
    %v98 = vld [vmem:[#allocation5 + $0x198] sm:$0xff]
    %v99 = vld [vmem:[#allocation5 + $0x1a0] sm:$0xff]
    %v100 = vld [vmem:[#allocation5 + $0x1a8] sm:$0xff]
    %v101 = vld [vmem:[#allocation5 + $0x1b0] sm:$0xff]
    %v102 = vld [vmem:[#allocation5 + $0x1b8] sm:$0xff]
    %v103 = vld [vmem:[#allocation5 + $0x1c0] sm:$0xff]
    %v104 = vld [vmem:[#allocation5 + $0x1c8] sm:$0xff]
    %v105 = vld [vmem:[#allocation5 + $0x1d0] sm:$0xff]
    %v106 = vld [vmem:[#allocation5 + $0x1d8] sm:$0xff]
    %v107 = vld [vmem:[#allocation5 + $0x1e0] sm:$0xff]
    %v108 = vld [vmem:[#allocation5 + $0x1e8] sm:$0xff]
    %v109 = vld [vmem:[#allocation5 + $0x1f0] sm:$0xff]
    %v110 = vld [vmem:[#allocation5 + $0x1f8] sm:$0xff]
    %v111 = vld [vmem:[#allocation5 + $0x200] sm:$0xff]
    %v112 = vld [vmem:[#allocation5 + $0x208] sm:$0xff]
    %v113 = vld [vmem:[#allocation5 + $0x210] sm:$0xff]
    %v114 = vld [vmem:[#allocation5 + $0x218] sm:$0xff]
    %v115 = vld [vmem:[#allocation5 + $0x220] sm:$0xff]
    %v116 = vld [vmem:[#allocation5 + $0x228] sm:$0xff]
    %v117 = vld [vmem:[#allocation5 + $0x230] sm:$0xff]
    %v118 = vld [vmem:[#allocation5 + $0x238] sm:$0xff]
    %v119 = vld [vmem:[#allocation5 + $0x240] sm:$0xff]
    %v120 = vld [vmem:[#allocation5 + $0x248] sm:$0xff]
    %v121 = vld [vmem:[#allocation5 + $0x250] sm:$0xff]
    %v122 = vld [vmem:[#allocation5 + $0x258] sm:$0xff]
    %v123 = vld [vmem:[#allocation5 + $0x260] sm:$0xff]
    %v124 = vld [vmem:[#allocation5 + $0x268] sm:$0xff]
    %v125 = vld [vmem:[#allocation5 + $0x270] sm:$0xff]
    %v126 = vld [vmem:[#allocation5 + $0x278] sm:$0xff]
    %v127 = vld [vmem:[#allocation5 + $0x280] sm:$0xff]
    %v128 = vld [vmem:[#allocation5 + $0x288] sm:$0xff]
    %v129 = vld [vmem:[#allocation5 + $0x290] sm:$0xff]
    %v130 = vld [vmem:[#allocation5 + $0x298] sm:$0xff]
    %v131 = vld [vmem:[#allocation5 + $0x2a0] sm:$0xff]
    %v132 = vld [vmem:[#allocation5 + $0x2a8] sm:$0xff]
    %v133 = vld [vmem:[#allocation5 + $0x2b0] sm:$0xff]
    %v134 = vld [vmem:[#allocation5 + $0x2b8] sm:$0xff]
    %v135 = vld [vmem:[#allocation5 + $0x2c0] sm:$0xff]
    %v136 = vld [vmem:[#allocation5 + $0x2c8] sm:$0xff]
    %v137 = vld [vmem:[#allocation5 + $0x2d0] sm:$0xff]
    %v138 = vld [vmem:[#allocation5 + $0x2d8] sm:$0xff]
    %v139 = vld [vmem:[#allocation5 + $0x2e0] sm:$0xff]
    %v140 = vld [vmem:[#allocation5 + $0x2e8] sm:$0xff]
    %v141 = vld [vmem:[#allocation5 + $0x2f0] sm:$0xff]
    %v142 = vld [vmem:[#allocation5 + $0x2f8] sm:$0xff]
    %v143 = vld [vmem:[%s2] sm:$0x1]
    %v145 = vlaneseq
    %v146 = vshrl.u32 %v145, 7
    %v147 = vsub.s32 0, %v146
    %v148 = vrot.slane %v143, %v147
    %150 = vmatprep.subr.mxu0 %v48
    %151 = vmatpush1.xpose.msra.mxu0 %v47
    %152 = vmatprep.subr.mxu0 %v54
    %153 = vmatpush1.xpose.msra.mxu0 %v53
    %154 = vmatprep.subr.mxu0 %v60
    %155 = vmatpush1.xpose.msra.mxu0 %v59
    %156 = vmatprep.subr.mxu0 %v66
    %157 = vmatpush1.xpose.msra.mxu0 %v65
    %158 = vmatprep.subr.mxu0 %v72
    %159 = vmatpush1.xpose.msra.mxu0 %v71
    %160 = vmatprep.subr.mxu0 %v78
    %161 = vmatpush1.xpose.msra.mxu0 %v77
    %162 = vmatprep.subr.mxu0 %v84
    %163 = vmatpush1.xpose.msra.mxu0 %v83
    %164 = vmatprep.subr.mxu0 %v90
    %165 = vmatpush1.xpose.msra.mxu0 %v89
    %166 = vmatprep.subr.mxu0 %v96
    %167 = vmatpush1.xpose.msra.mxu0 %v95
    %168 = vmatprep.subr.mxu0 %v102
    %169 = vmatpush1.xpose.msra.mxu0 %v101
    %170 = vmatprep.subr.mxu0 %v108
    %171 = vmatpush1.xpose.msra.mxu0 %v107
    %172 = vmatprep.subr.mxu0 %v114
    %173 = vmatpush1.xpose.msra.mxu0 %v113
    %174 = vmatprep.subr.mxu0 %v120
    %175 = vmatpush1.xpose.msra.mxu0 %v119
    %176 = vmatprep.subr.mxu0 %v126
    %177 = vmatpush1.xpose.msra.mxu0 %v125
    %178 = vmatprep.subr.mxu0 %v132
    %179 = vmatpush1.xpose.msra.mxu0 %v131
    %180 = vmatprep.subr.mxu0 %v138
    %181 = vmatpush1.xpose.msra.mxu0 %v137
    %182 = vmatprep.subr.mxu0 0.0
    %183 = vmatpush1.xpose.msra.mxu0 0.0
    %184 = vmatprep.subr.mxu0 0.0
    %185 = vmatpush1.xpose.msra.mxu0 0.0
    %186 = vmatprep.subr.mxu0 0.0
    %187 = vmatpush1.xpose.msra.mxu0 0.0
    %188 = vmatprep.subr.mxu0 0.0
    %189 = vmatpush1.xpose.msra.mxu0 0.0
    %190 = vmatprep.subr.mxu0 0.0
    %191 = vmatpush1.xpose.msra.mxu0 0.0
    %192 = vmatprep.subr.mxu0 0.0
    %193 = vmatpush1.xpose.msra.mxu0 0.0
    %194 = vmatprep.subr.mxu0 0.0
    %195 = vmatpush1.xpose.msra.mxu0 0.0
    %196 = vmatprep.subr.mxu0 0.0
    %197 = vmatpush1.xpose.msra.mxu0 0.0
    %198 = vmatprep.subr.mxu0 0.0
    %199 = vmatpush1.xpose.msra.mxu0 0.0
    %200 = vmatprep.subr.mxu0 0.0
    %201 = vmatpush1.xpose.msra.mxu0 0.0
    %202 = vmatprep.subr.mxu0 0.0
    %203 = vmatpush1.xpose.msra.mxu0 0.0
    %204 = vmatprep.subr.mxu0 0.0
    %205 = vmatpush1.xpose.msra.mxu0 0.0
    %206 = vmatprep.subr.mxu0 0.0
    %207 = vmatpush1.xpose.msra.mxu0 0.0
    %208 = vmatprep.subr.mxu0 0.0
    %209 = vmatpush1.xpose.msra.mxu0 0.0
    %210 = vmatprep.subr.mxu0 0.0
    %211 = vmatpush1.xpose.msra.mxu0 0.0
    %212 = vmatprep.subr.mxu0 0.0
    %213 = vmatpush1.xpose.msra.mxu0 0.0
    %214 = vmatprep.mubr.f32.mxu0 %v42
    %215 = vmatmul.mubr.f32.gmra.mrb[0].mxu0 %v41
    %v216 = vpop.f32.mrb[0].mxu0
    %v217 = vadd.f32 %v148, %v216
    %v218 = vpop.f32.mrb[0].mxu0
    %219 = vdwg.mxu0
    %220 = vmatprep.subr.mxu0 %v50
    %221 = vmatpush1.xpose.msra.mxu0 %v49
    %222 = vmatprep.subr.mxu0 %v56
    %223 = vmatpush1.xpose.msra.mxu0 %v55
    %224 = vmatprep.subr.mxu0 %v62
    %225 = vmatpush1.xpose.msra.mxu0 %v61
    %226 = vmatprep.subr.mxu0 %v68
    %227 = vmatpush1.xpose.msra.mxu0 %v67
    %228 = vmatprep.subr.mxu0 %v74
    %229 = vmatpush1.xpose.msra.mxu0 %v73
    %230 = vmatprep.subr.mxu0 %v80
    %231 = vmatpush1.xpose.msra.mxu0 %v79
    %232 = vmatprep.subr.mxu0 %v86
    %233 = vmatpush1.xpose.msra.mxu0 %v85
    %234 = vmatprep.subr.mxu0 %v92
    %235 = vmatpush1.xpose.msra.mxu0 %v91
    %236 = vmatprep.subr.mxu0 %v98
    %237 = vmatpush1.xpose.msra.mxu0 %v97
    %238 = vmatprep.subr.mxu0 %v104
    %239 = vmatpush1.xpose.msra.mxu0 %v103
    %240 = vmatprep.subr.mxu0 %v110
    %241 = vmatpush1.xpose.msra.mxu0 %v109
    %242 = vmatprep.subr.mxu0 %v116
    %243 = vmatpush1.xpose.msra.mxu0 %v115
    %244 = vmatprep.subr.mxu0 %v122
    %245 = vmatpush1.xpose.msra.mxu0 %v121
    %246 = vmatprep.subr.mxu0 %v128
    %247 = vmatpush1.xpose.msra.mxu0 %v127
    %248 = vmatprep.subr.mxu0 %v134
    %249 = vmatpush1.xpose.msra.mxu0 %v133
    %250 = vmatprep.subr.mxu0 %v140
    %251 = vmatpush1.xpose.msra.mxu0 %v139
    %252 = vmatprep.subr.mxu0 0.0
    %253 = vmatpush1.xpose.msra.mxu0 0.0
    %254 = vmatprep.subr.mxu0 0.0
    %255 = vmatpush1.xpose.msra.mxu0 0.0
    %256 = vmatprep.subr.mxu0 0.0
    %257 = vmatpush1.xpose.msra.mxu0 0.0
    %258 = vmatprep.subr.mxu0 0.0
    %259 = vmatpush1.xpose.msra.mxu0 0.0
    %260 = vmatprep.subr.mxu0 0.0
    %261 = vmatpush1.xpose.msra.mxu0 0.0
    %262 = vmatprep.subr.mxu0 0.0
    %263 = vmatpush1.xpose.msra.mxu0 0.0
    %264 = vmatprep.subr.mxu0 0.0
    %265 = vmatpush1.xpose.msra.mxu0 0.0
    %266 = vmatprep.subr.mxu0 0.0
    %267 = vmatpush1.xpose.msra.mxu0 0.0
    %268 = vmatprep.subr.mxu0 0.0
    %269 = vmatpush1.xpose.msra.mxu0 0.0
    %270 = vmatprep.subr.mxu0 0.0
    %271 = vmatpush1.xpose.msra.mxu0 0.0
    %272 = vmatprep.subr.mxu0 0.0
    %273 = vmatpush1.xpose.msra.mxu0 0.0
    %274 = vmatprep.subr.mxu0 0.0
    %275 = vmatpush1.xpose.msra.mxu0 0.0
    %276 = vmatprep.subr.mxu0 0.0
    %277 = vmatpush1.xpose.msra.mxu0 0.0
    %278 = vmatprep.subr.mxu0 0.0
    %279 = vmatpush1.xpose.msra.mxu0 0.0
    %280 = vmatprep.subr.mxu0 0.0
    %281 = vmatpush1.xpose.msra.mxu0 0.0
    %282 = vmatprep.subr.mxu0 0.0
    %283 = vmatpush1.xpose.msra.mxu0 0.0
    %284 = vmatprep.mubr.f32.mxu0 %v44
    %285 = vmatmul.mubr.f32.gmra.mrb[0].mxu0 %v43
    %v286 = vpop.f32.mrb[0].mxu0
    %v287 = vadd.f32 %v217, %v286
    %v288 = vpop.f32.mrb[0].mxu0
    %289 = vdwg.mxu0
    %290 = vmatprep.subr.mxu0 %v52
    %291 = vmatpush1.xpose.msra.mxu0 %v51
    %292 = vmatprep.subr.mxu0 %v58
    %293 = vmatpush1.xpose.msra.mxu0 %v57
    %294 = vmatprep.subr.mxu0 %v64
    %295 = vmatpush1.xpose.msra.mxu0 %v63
    %296 = vmatprep.subr.mxu0 %v70
    %297 = vmatpush1.xpose.msra.mxu0 %v69
    %298 = vmatprep.subr.mxu0 %v76
    %299 = vmatpush1.xpose.msra.mxu0 %v75
    %300 = vmatprep.subr.mxu0 %v82
    %301 = vmatpush1.xpose.msra.mxu0 %v81
    %302 = vmatprep.subr.mxu0 %v88
    %303 = vmatpush1.xpose.msra.mxu0 %v87
    %304 = vmatprep.subr.mxu0 %v94
    %305 = vmatpush1.xpose.msra.mxu0 %v93
    %306 = vmatprep.subr.mxu0 %v100
    %307 = vmatpush1.xpose.msra.mxu0 %v99
    %308 = vmatprep.subr.mxu0 %v106
    %309 = vmatpush1.xpose.msra.mxu0 %v105
    %310 = vmatprep.subr.mxu0 %v112
    %311 = vmatpush1.xpose.msra.mxu0 %v111
    %312 = vmatprep.subr.mxu0 %v118
    %313 = vmatpush1.xpose.msra.mxu0 %v117
    %314 = vmatprep.subr.mxu0 %v124
    %315 = vmatpush1.xpose.msra.mxu0 %v123
    %316 = vmatprep.subr.mxu0 %v130
    %317 = vmatpush1.xpose.msra.mxu0 %v129
    %318 = vmatprep.subr.mxu0 %v136
    %319 = vmatpush1.xpose.msra.mxu0 %v135
    %320 = vmatprep.subr.mxu0 %v142
    %321 = vmatpush1.xpose.msra.mxu0 %v141
    %322 = vmatprep.subr.mxu0 0.0
    %323 = vmatpush1.xpose.msra.mxu0 0.0
    %324 = vmatprep.subr.mxu0 0.0
    %325 = vmatpush1.xpose.msra.mxu0 0.0
    %326 = vmatprep.subr.mxu0 0.0
    %327 = vmatpush1.xpose.msra.mxu0 0.0
    %328 = vmatprep.subr.mxu0 0.0
    %329 = vmatpush1.xpose.msra.mxu0 0.0
    %330 = vmatprep.subr.mxu0 0.0
    %331 = vmatpush1.xpose.msra.mxu0 0.0
    %332 = vmatprep.subr.mxu0 0.0
    %333 = vmatpush1.xpose.msra.mxu0 0.0
    %334 = vmatprep.subr.mxu0 0.0
    %335 = vmatpush1.xpose.msra.mxu0 0.0
    %336 = vmatprep.subr.mxu0 0.0
    %337 = vmatpush1.xpose.msra.mxu0 0.0
    %338 = vmatprep.subr.mxu0 0.0
    %339 = vmatpush1.xpose.msra.mxu0 0.0
    %340 = vmatprep.subr.mxu0 0.0
    %341 = vmatpush1.xpose.msra.mxu0 0.0
    %342 = vmatprep.subr.mxu0 0.0
    %343 = vmatpush1.xpose.msra.mxu0 0.0
    %344 = vmatprep.subr.mxu0 0.0
    %345 = vmatpush1.xpose.msra.mxu0 0.0
    %346 = vmatprep.subr.mxu0 0.0
    %347 = vmatpush1.xpose.msra.mxu0 0.0
    %348 = vmatprep.subr.mxu0 0.0
    %349 = vmatpush1.xpose.msra.mxu0 0.0
    %350 = vmatprep.subr.mxu0 0.0
    %351 = vmatpush1.xpose.msra.mxu0 0.0
    %352 = vmatprep.subr.mxu0 0.0
    %353 = vmatpush1.xpose.msra.mxu0 0.0
    %354 = vmatprep.mubr.f32.mxu0 %v46
    %355 = vmatmul.mubr.f32.gmra.mrb[0].mxu0 %v45
    %v356 = vpop.f32.mrb[0].mxu0
    %v357 = vadd.f32 %v287, %v356
    %v358 = vpop.f32.mrb[0].mxu0
    %359 = vdwg.mxu0
    %360 = vst [vmem:[#allocation7] sm:$0xff] %v357
    // Predicated region
    $region22: #{tpu_custom_call.1} parent=1 // pred_check
      _
    $region23: #{tpu_custom_call.1} parent=1 // pred_check_branch
      %362 = sbr.rel (0) target = $region25
    $region24: #{tpu_custom_call.1} parent=1 // pred_region
      %s364 = ssub.s32 128, 128
      %365 = vsyncadd [#allocation4], %s364
      %s367 = sshll.u32 [#allocation7], 4
      %s368 = int_to_ptr.vmem [resolvable:$true] %s367
      %370 = dma.vmem_to_hbm [thread:$0]  %s368, 128, %s3, [#allocation4]
    $region25: #{tpu_custom_call.1} parent=1 // pred_fallthru
      _
    // Predicated region
    $region26: #{tpu_custom_call.1} parent=1 // pred_check
      _
    $region27: #{tpu_custom_call.1} parent=1 // pred_check_branch
      %372 = sbr.rel (0) target = $region29
    $region28: #{tpu_custom_call.1} parent=1 // pred_region
      %373 = dma.done [#allocation4], 128
    $region29: #{tpu_custom_call.1} parent=1 // pred_fallthru
      _
    %374 = vsyncpa [#allocation3], 1
    %375 = vsyncpa [#allocation6], 1
    %376 = vsyncpa [#allocation4], 1

</llo_original>
